<compile_context>
chip_gen: v7x
topology: tpu7x:2x2x1
jax: 0.10.0
libtpu: 0.0.40
codegen_flags: <defaults>
</compile_context>

<pallas_src>
import functools

import jax
import jax.numpy as jnp
from jax.experimental import pallas as pl
from jax.experimental.pallas import tpu as pltpu

_VMEM = pltpu.MemorySpace.VMEM
_SMEM = pltpu.MemorySpace.SMEM
_LANES = 128
_SUBLANES = 8


# ----------------------------------------------------------------------------
# Fused MSE kernel: (x - t)^2 sum -> scalar mean via SMEM
# ----------------------------------------------------------------------------
def _mse_kernel(x_ref, t_ref, o_ref, *, inv_n):
    d = x_ref[...] - t_ref[...]            # full (rows, 128) f32 slab in vregs
    o_ref[0] = jnp.sum(d * d) * inv_n      # scalar result out through SMEM


def _pack_lane_dense(a):
    """Flatten to a (rows, 128) f32 slab, rows padded to a multiple of 8.

    A contiguous reshape plus a small zero-pad is cheap wrapper-side glue; the
    zero pads cancel in (x - t), so they add exactly 0 to the squared-error sum.
    """
    flat = a.reshape(-1).astype(jnp.float32)
    n = flat.shape[0]
    rows = -(-n // _LANES)
    rows = ((rows + _SUBLANES - 1) // _SUBLANES) * _SUBLANES
    pad = rows * _LANES - n
    if pad:
        flat = jnp.pad(flat, (0, pad))
    return flat.reshape(rows, _LANES)


def mse_loss(x, target):
    """F.mse_loss(x, target) (mean reduction) as one Pallas TPU kernel."""
    assert x.shape == target.shape, (x.shape, target.shape)
    n = x.size
    xp = _pack_lane_dense(x)
    tp = _pack_lane_dense(target)
    out = pl.pallas_call(
        functools.partial(_mse_kernel, inv_n=1.0 / float(n)),
        out_shape=jax.ShapeDtypeStruct((1,), jnp.float32),
        in_specs=[
            pl.BlockSpec(memory_space=_VMEM),   # whole slab, single invocation
            pl.BlockSpec(memory_space=_VMEM),
        ],
        out_specs=pl.BlockSpec(memory_space=_SMEM),   # scalar output via SMEM
        cost_estimate=pl.CostEstimate(
            flops=3 * n, transcendentals=0, bytes_accessed=8 * n + 4),
    )(xp, tp)
    return out[0]


# ----------------------------------------------------------------------------
# Module port
# ----------------------------------------------------------------------------
class ContentLoss:
    """JAX/Pallas port of guided_diffusion.gram_util.ContentLoss.

    PyTorch stores the loss as a module attribute (side effect) and returns the
    input unchanged.  Attribute side effects don't survive jit tracing, so
    __call__ returns (input, loss) instead; `input` is passed through untouched.
    """

    def __init__(self, target):
        self.target = jax.lax.stop_gradient(target)   # target.detach()

    def __call__(self, x):
        loss = mse_loss(x, self.target)
        return x, loss


if __name__ == "__main__":
    key = jax.random.PRNGKey(0)
    k_target, k_input = jax.random.split(key)

    target = jax.random.uniform(k_target, (2, 4, 16, 16), dtype=jnp.float32)
    x = jax.random.uniform(k_input, (2, 4, 16, 16), dtype=jnp.float32)

    model = ContentLoss(target)
    out, loss = jax.jit(lambda v: model(v))(x)
    jax.block_until_ready((out, loss))

    # correctness: passthrough + f32 MSE vs pure-JAX reference
    ref = jnp.mean((x - target) ** 2)
    assert out.shape == x.shape and out.dtype == x.dtype
    assert bool(jnp.allclose(out, x))
    assert bool(jnp.allclose(loss, ref, rtol=1e-4, atol=1e-6)), (loss, ref)

    print("KERNEL_OK")
</pallas_src>

<mosaic_0001>
module attributes {stable_mosaic.version = 11 : i64} {
  func.func @_mse_kernel(%arg0: memref<16x128xf32, #tpu.memory_space<vmem>>, %arg1: memref<16x128xf32, #tpu.memory_space<vmem>>, %arg2: memref<1xf32, #tpu.memory_space<smem>>) attributes {dimension_semantics = [], scalar_prefetch = 0 : i64, scratch_operands = 0 : i64, tpu.core_type = #tpu.core_type<tc>} {
    %c0 = arith.constant 0 : index
    %c0_0 = arith.constant 0 : index
    %0 = vector.load %arg0[%c0, %c0_0] : memref<16x128xf32, #tpu.memory_space<vmem>>, vector<16x128xf32>
    %c0_1 = arith.constant 0 : index
    %c0_2 = arith.constant 0 : index
    %1 = vector.load %arg1[%c0_1, %c0_2] : memref<16x128xf32, #tpu.memory_space<vmem>>, vector<16x128xf32>
    %2 = arith.subf %0, %1 : vector<16x128xf32>
    %3 = arith.mulf %2, %2 : vector<16x128xf32>
    %4 = vector.shape_cast %3 : vector<16x128xf32> to vector<1x16x128xf32>
    %cst = arith.constant dense<0.000000e+00> : vector<1xf32>
    %5 = vector.multi_reduction <add>, %4, %cst [1, 2] : vector<1x16x128xf32> to vector<1xf32>
    %6 = vector.shape_cast %5 : vector<1xf32> to vector<1x1x1xf32>
    %7 = vector.extract %6[0, 0, 0] : f32 from vector<1x1x1xf32>
    %cst_3 = arith.constant 4.8828125E-4 : f32
    %8 = arith.mulf %7, %cst_3 : f32
    %c0_4 = arith.constant 0 : index
    %9 = memref.load %arg2[%c0_4] : memref<1xf32, #tpu.memory_space<smem>>
    memref.store %8, %arg2[%c0_4] : memref<1xf32, #tpu.memory_space<smem>>
    return
  }
}

</mosaic_0001>

<llo_original>
// kernel: _lambda_.1
$region0: #{_lambda_.1}
  #allocation0 [shape = 'u32[]', space=smem, size = 0x4, offset = 0x4, fixed_abs, tag = 'smem constant byte address 0x4 - core index']
  #allocation1 [shape = 'u32[144,128]{1,0:T(1,128)}', space=vmem, size = 0x12000, scoped, tag = 'internal scratch']
  %s0 = inlined_call_operand.vmem [shape: f32[16,128], index: 0, kind: input, shape index: {}]
  %s1 = inlined_call_operand.vmem [shape: f32[16,128], index: 1, kind: input, shape index: {}]
  %s2 = inlined_call_operand.hbm [shape: f32[1], index: 2, kind: output, shape index: {}]
  %s3 = sld [smem:[#allocation0]]
  $region18: #{_lambda_.1} parent=0
    _
  %s5 = ssub.s32 1, %s3
  %s6 = scalar_select 0, %s5, %s3
  $region1: #{_lambda_.1} parent=0
    #allocation2 [shape = 'u8[512]{0}', space=smem, size = 0x200, scoped, tag = 'output window, operand 0, single buffered']
    #allocation3 [shape = 's32[1]{0}', space=sflag, size = 0x4, scoped, tag = 'scoped memory for _lambda_.1']
    %7 = vsyncpa [#allocation3], 0
    // Predicated region
    $region2: #{_lambda_.1} parent=1 // pred_check
      _
    $region3: #{_lambda_.1} parent=1 // pred_check_branch
      %9 = sbr.rel (0) target = $region5
    $region4: #{_lambda_.1} parent=1 // pred_region
      _
    $region5: #{_lambda_.1} parent=1 // pred_fallthru
      _
    // Predicated region
    $region6: #{_lambda_.1} parent=1 // pred_check
      _
    $region7: #{_lambda_.1} parent=1 // pred_check_branch
      %11 = sbr.rel (0) target = $region9
    $region8: #{_lambda_.1} parent=1 // pred_region
      _
    $region9: #{_lambda_.1} parent=1 // pred_fallthru
      _
    %v12 = vld [vmem:[%s0] sm:$0xff]
    %v13 = vld [vmem:[%s0 + $0x8] sm:$0xff]
    %v14 = vld [vmem:[%s1] sm:$0xff]
    %v15 = vld [vmem:[%s1 + $0x8] sm:$0xff]
    %v16 = vsub.f32 %v12, %v14
    %v17 = vsub.f32 %v13, %v15
    %v18 = vmul.f32 %v16, %v16
    %v19 = vmul.f32 %v17, %v17
    %v20 = vadd.f32 %v18, %v19
    %21 = vadd.xlane.f32.xlu0 %v20
    %v22 = vpop.xlane.xlu0 %21
    %v23 = vrot.slane %v22, 4
    %v24 = vadd.f32 %v22, %v23
    %v25 = vrot.slane %v24, 2
    %v26 = vadd.f32 %v24, %v25
    %v27 = vrot.slane %v26, 1
    %v28 = vadd.f32 %v26, %v27
    %s29 = vtos %v28
    %s30 = smul.f32 %s29, 0.00048828125
    %s31 = scalar_lea.smem [#allocation2], 0
    %32 = sst [smem:[%s31]] %s30
    // Predicated region
    $region10: #{_lambda_.1} parent=1 // pred_check
      _
    $region11: #{_lambda_.1} parent=1 // pred_check_branch
      %34 = sbr.rel (0) target = $region13
    $region12: #{_lambda_.1} parent=1 // pred_region
      %s36 = ssub.s32 16, 16
      %37 = vsyncadd [#allocation3], %s36
      %40 = dma.smem_to_hbm [#allocation2], 16, %s2, [#allocation3]
    $region13: #{_lambda_.1} parent=1 // pred_fallthru
      _
    // Predicated region
    $region14: #{_lambda_.1} parent=1 // pred_check
      _
    $region15: #{_lambda_.1} parent=1 // pred_check_branch
      %42 = sbr.rel (0) target = $region17
    $region16: #{_lambda_.1} parent=1 // pred_region
      %43 = dma.done [#allocation3], 16
    $region17: #{_lambda_.1} parent=1 // pred_fallthru
      _
    %44 = sfence
    %45 = vsyncpa [#allocation3], 1

</llo_original>
